<compile_context>
chip_gen: v7x
topology: tpu7x:2x2x1
jax: 0.10.0
libtpu: 0.0.40
codegen_flags: <defaults>
</compile_context>

<pallas_src>
import functools

import jax
import jax.numpy as jnp
import numpy as np
from jax.experimental import pallas as pl
from jax.experimental.pallas import tpu as pltpu


# ---------------------------------------------------------------------------
# tiling helpers
# ---------------------------------------------------------------------------
_MAX_BLOCK_ROWS = 2048


def _round_up(x, m):
    return ((x + m - 1) // m) * m


def _vmem_capacity_bytes(default=64 * 1024 * 1024):
    """Physical VMEM per core; conservative 64 MiB (v7x-sized) fallback."""
    try:
        info = pltpu.get_tpu_info()
    except Exception:
        return default
    for attr in ("vmem_capacity_bytes", "vmem_bytes", "vmem_size_bytes"):
        v = getattr(info, attr, None)
        if isinstance(v, (int, np.integer)) and int(v) > 0:
            return int(v)
    return default


def _pick_tiling(num_rows, lane_width, in_itemsize):
    """Row-block size (multiple of the sublane tile) + scoped VMEM limit."""
    vmem_limit = min(_vmem_capacity_bytes() // 2, 64 * 1024 * 1024)
    padded_w = _round_up(max(int(lane_width), 1), 128)   # VMEM lane padding
    mult = 8 if in_itemsize >= 4 else (16 if in_itemsize == 2 else 32)
    live = 12   # pipeline buffers + in-kernel f32 temporaries (post concat removal)
    max_block = (vmem_limit // 2) // (live * padded_w * 4)
    max_block = max(mult, min(int(max_block), _MAX_BLOCK_ROWS))
    max_block = (max_block // mult) * mult
    # Rebalance so padding never exceeds ~one sublane tile of rows.
    num_rows = max(int(num_rows), 1)
    n_blocks = max(1, -(-num_rows // max_block))
    br = _round_up(-(-num_rows // n_blocks), mult)
    br = max(mult, min(br, _round_up(num_rows, mult)))
    return br, int(vmem_limit)


def _cost_estimate(rows, n, log_counts, in_itemsize):
    elems = int(rows) * int(n)
    return pl.CostEstimate(
        flops=elems * 24,
        transcendentals=elems * 2 if log_counts else 0,
        bytes_accessed=elems * (2 * int(in_itemsize) + 4))


def _pallas_streaming_call(kernel, p, q, block_rows, vmem_limit, cost):
    rows, width = p.shape
    assert rows % block_rows == 0, (rows, block_rows)
    return pl.pallas_call(
        kernel,
        out_shape=jax.ShapeDtypeStruct((rows, width), jnp.float32),
        grid_spec=pltpu.PrefetchScalarGridSpec(
            num_scalar_prefetch=0,
            grid=(rows // block_rows,),
            in_specs=[pl.BlockSpec((block_rows, width), lambda i: (i, 0)),
                      pl.BlockSpec((block_rows, width), lambda i: (i, 0))],
            out_specs=pl.BlockSpec((block_rows, width), lambda i: (i, 0)),
        ),
        compiler_params=pltpu.CompilerParams(
            dimension_semantics=("parallel",),
            vmem_limit_bytes=int(vmem_limit)),
        cost_estimate=cost,
    )(p, q)


# ---------------------------------------------------------------------------
# kernels
# ---------------------------------------------------------------------------
def _packed_kernel(p_ref, q_ref, o_ref, *, group, eps, log_counts, sum_counts,
                   ratio):
    """Lane-dense path: each 128-lane row packs 128 // group original rows."""
    p = p_ref[...].astype(jnp.float32)
    q = q_ref[...].astype(jnp.float32)
    br, width = p.shape                      # width == 128
    inv_n = 1.0 / float(group)

    # Butterfly step masks, hoisted once per grid step.  The mask for step s
    # selects, per lane j, whichever roll sources lane j ^ s.  It is derived
    # by rolling a lane iota with the same pltpu.roll primitive, so it is
    # correct regardless of the roll direction convention.
    steps = []
    if group > 1:
        lane8 = jax.lax.broadcasted_iota(jnp.int32, (8, width), 1)
        lane1 = lane8[0:1, :]
        s = 1
        while s < group:
            src = pltpu.roll(lane8, s, axis=1)[0:1, :]
            pick_fwd = (src == (lane1 ^ s)).astype(jnp.int32)       # (1, width)
            mask = jnp.broadcast_to(pick_fwd, (br, width)) == 1     # (br, width)
            steps.append((s, mask))
            s *= 2

    def seg_reduce(x, op):
        # XOR-butterfly all-reduce within aligned groups of `group` lanes;
        # every lane ends up holding its group's reduction.
        for s, mask in steps:
            fwd = pltpu.roll(x, s, axis=1)
            bwd = pltpu.roll(x, width - s, axis=1)
            x = op(x, jnp.where(mask, fwd, bwd))
        return x

    minp = seg_reduce(p, jnp.minimum)
    minq = seg_reduce(q, jnp.minimum)
    pd = p - minp
    qd = q - minq
    normp = seg_reduce(pd, jnp.add)          # sum(p - min) per group, replicated
    normq = seg_reduce(qd, jnp.add)
    safep = jnp.where(normp == 0.0, 1.0, normp)
    safeq = jnp.where(normq == 0.0, 1.0, normq)
    dist = pd / safep - qd / safeq

    if log_counts:
        pc = jnp.log(p + eps)
        qc = jnp.log(q + eps)
    else:
        pc, qc = p, q
    if sum_counts:
        if log_counts:
            cdiff = (seg_reduce(pc, jnp.add) - seg_reduce(qc, jnp.add)) * inv_n
        else:
            # mean(p) - mean(q) == (sum(p-min_p) - sum(q-min_q))/N + (min_p - min_q)
            cdiff = (normp - normq) * inv_n + (minp - minq)
        count_sq = cdiff * cdiff
    else:
        d = pc - qc
        count_sq = d * d

    o_ref[...] = (count_sq + ratio * (dist * dist)).astype(o_ref.dtype)


def _plain_kernel(p_ref, q_ref, o_ref, *, eps, log_counts, sum_counts, ratio):
    """Straightforward path: rows on sublanes, the full N axis on lanes."""
    p = p_ref[...].astype(jnp.float32)
    q = q_ref[...].astype(jnp.float32)

    minp = jnp.min(p, axis=-1, keepdims=True)
    minq = jnp.min(q, axis=-1, keepdims=True)
    pd = p - minp
    qd = q - minq
    normp = jnp.sum(pd, axis=-1, keepdims=True)
    normq = jnp.sum(qd, axis=-1, keepdims=True)
    normp = jnp.where(normp == 0.0, 1.0, normp)
    normq = jnp.where(normq == 0.0, 1.0, normq)
    dist = pd / normp - qd / normq

    if log_counts:
        pc = jnp.log(p + eps)
        qc = jnp.log(q + eps)
    else:
        pc, qc = p, q
    if sum_counts:
        cdiff = jnp.mean(pc - qc, axis=-1, keepdims=True)   # (rows, 1) broadcasts
        count_sq = cdiff * cdiff
    else:
        d = pc - qc
        count_sq = d * d

    o_ref[...] = (count_sq + ratio * (dist * dist)).astype(o_ref.dtype)


# ---------------------------------------------------------------------------
# wrappers
# ---------------------------------------------------------------------------
def _run_packed(p2, q2, rows, n, cfg):
    g = 128 // n
    packed_rows = -(-rows // g)                              # ceil(rows / g)
    itemsize = max(p2.dtype.itemsize, q2.dtype.itemsize)
    block_rows, vmem_limit = _pick_tiling(packed_rows, 128, itemsize)
    r_pad = _round_up(packed_rows, block_rows)
    total = r_pad * g
    if total != rows:                        # single pad covers packing + block rounding
        p2 = jnp.pad(p2, ((0, total - rows), (0, 0)))
        q2 = jnp.pad(q2, ((0, total - rows), (0, 0)))
    pk = p2.reshape(r_pad, 128)              # contiguous, layout-free reshape
    qk = q2.reshape(r_pad, 128)
    kernel = functools.partial(_packed_kernel, group=n, **cfg)
    out = _pallas_streaming_call(kernel, pk, qk, block_rows, vmem_limit,
                                 _cost_estimate(rows, n, cfg["log_counts"], itemsize))
    out = out.reshape(total, n)              # single reshape + at most one slice
    return out if total == rows else out[:rows]


def _run_plain(p2, q2, rows, n, cfg):
    itemsize = max(p2.dtype.itemsize, q2.dtype.itemsize)
    block_rows, vmem_limit = _pick_tiling(rows, n, itemsize)
    rows_pad = _round_up(rows, block_rows)
    if rows_pad != rows:
        p2 = jnp.pad(p2, ((0, rows_pad - rows), (0, 0)))
        q2 = jnp.pad(q2, ((0, rows_pad - rows), (0, 0)))
    kernel = functools.partial(_plain_kernel, **cfg)
    out = _pallas_streaming_call(kernel, p2, q2, block_rows, vmem_limit,
                                 _cost_estimate(rows, n, cfg["log_counts"], itemsize))
    return out if rows_pad == rows else out[:rows]


def log_count_dist_loss(p, q, *, eps=1.0, log_counts=False, sum_counts=True,
                        ratio=10.0):
    """Pallas implementation of LogCountDistLoss.forward (reduction='none').

    Inputs keep their original dtype on the way into the kernel (cast to f32
    inside); the result is always float32.
    """
    p = jnp.asarray(p)
    q = jnp.asarray(q)
    assert p.shape == q.shape, (p.shape, q.shape)
    orig_shape = p.shape
    n = int(orig_shape[-1])
    rows = 1
    for d in orig_shape[:-1]:
        rows *= int(d)
    p2 = p.reshape(rows, n)
    q2 = q.reshape(rows, n)
    cfg = dict(eps=float(eps), log_counts=bool(log_counts),
               sum_counts=bool(sum_counts), ratio=float(ratio))

    # Static dispatch: lane-dense packed path whenever N divides 128
    # (divisors of 128 are powers of two, as the butterfly requires).
    if 0 < n < 128 and 128 % n == 0:
        out = _run_packed(p2, q2, rows, n, cfg)
    else:
        out = _run_plain(p2, q2, rows, n, cfg)
    return out.reshape(orig_shape)


# ---------------------------------------------------------------------------
# reference + self-test
# ---------------------------------------------------------------------------
def _reference(p, q, *, eps=1.0, log_counts=False, sum_counts=True, ratio=10.0):
    """Pure-JAX reference mirroring the PyTorch module."""
    p = p.astype(jnp.float32)
    q = q.astype(jnp.float32)
    pn = p - jnp.min(p, axis=-1, keepdims=True)
    qn = q - jnp.min(q, axis=-1, keepdims=True)
    normp = jnp.sum(pn, axis=-1, keepdims=True)
    normq = jnp.sum(qn, axis=-1, keepdims=True)
    normp = jnp.where(normp == 0.0, 1.0, normp)
    normq = jnp.where(normq == 0.0, 1.0, normq)
    pn = pn / normp
    qn = qn / normq
    if log_counts:
        p = jnp.log(p + eps)
        q = jnp.log(q + eps)
    if sum_counts:
        p = jnp.broadcast_to(jnp.mean(p, axis=-1, keepdims=True), p.shape)
        q = jnp.broadcast_to(jnp.mean(q, axis=-1, keepdims=True), q.shape)
    return (p - q) ** 2 + ratio * (pn - qn) ** 2


if __name__ == "__main__":
    # LogCountDistLoss has no learnable parameters; only inputs p, q are needed.
    def _check(shape, key, dtype=jnp.float32, rtol=1e-4, atol=1e-5, **cfg):
        kp, kq = jax.random.split(key)
        p = (jax.random.uniform(kp, shape, dtype=jnp.float32) * 5.0).astype(dtype)
        q = (jax.random.uniform(kq, shape, dtype=jnp.float32) * 5.0).astype(dtype)
        out = jax.block_until_ready(log_count_dist_loss(p, q, **cfg))
        ref = _reference(p, q, **cfg)
        assert out.shape == p.shape, (out.shape, p.shape)
        np.testing.assert_allclose(np.asarray(out), np.asarray(ref),
                                   rtol=rtol, atol=atol)

    keys = jax.random.split(jax.random.PRNGKey(0), 5)
    # main shape: batch=2, channels=4, distribution length N=16
    _check((2, 4, 16), keys[0])                        # packed lane-dense path
    _check((50, 3, 16), keys[1])                       # packed path + row padding
    _check((3, 5, 24), keys[2])                        # plain path (24 does not divide 128)
    _check((2, 4, 16), keys[3], log_counts=True, sum_counts=False)
    _check((4, 4, 16), keys[4], dtype=jnp.bfloat16,    # bf16 inputs, no wrapper cast
           rtol=1e-3, atol=1e-4)
    print("KERNEL_OK")
</pallas_src>

<mosaic_0001>
module attributes {stable_mosaic.version = 11 : i64} {
  func.func @_packed_kernel(%arg0: i32, %arg1: memref<8x128xf32, #tpu.memory_space<vmem>>, %arg2: memref<8x128xf32, #tpu.memory_space<vmem>>, %arg3: memref<8x128xf32, #tpu.memory_space<vmem>>) attributes {dimension_semantics = [#tpu.dimension_semantics<parallel>], iteration_bounds = array<i64: 1>, scalar_prefetch = 0 : i64, scratch_operands = 0 : i64, tpu.core_type = #tpu.core_type<tc>, window_params = [{transform_indices = @transform_0, window_bounds = array<i64: 8, 128>}, {transform_indices = @transform_1, window_bounds = array<i64: 8, 128>}, {transform_indices = @transform_2, window_bounds = array<i64: 8, 128>}]} {
    %c0 = arith.constant 0 : index
    %c0_0 = arith.constant 0 : index
    %0 = vector.load %arg1[%c0, %c0_0] : memref<8x128xf32, #tpu.memory_space<vmem>>, vector<8x128xf32>
    %c0_1 = arith.constant 0 : index
    %c0_2 = arith.constant 0 : index
    %1 = vector.load %arg2[%c0_1, %c0_2] : memref<8x128xf32, #tpu.memory_space<vmem>>, vector<8x128xf32>
    %2 = tpu.iota {dimensions = array<i32: 1>} : vector<8x128xi32>
    %3 = vector.extract_strided_slice %2 {offsets = [0, 0], sizes = [1, 128], strides = [1, 1]} : vector<8x128xi32> to vector<1x128xi32>
    %c1_i32 = arith.constant 1 : i32
    %4 = tpu.dynamic_rotate %2 by %c1_i32 dim 1 : vector<8x128xi32>, i32 -> vector<8x128xi32>
    %5 = vector.extract_strided_slice %4 {offsets = [0, 0], sizes = [1, 128], strides = [1, 1]} : vector<8x128xi32> to vector<1x128xi32>
    %c1_i32_3 = arith.constant 1 : i32
    %6 = vector.broadcast %c1_i32_3 : i32 to vector<1x128xi32>
    %7 = arith.xori %3, %6 : vector<1x128xi32>
    %8 = arith.cmpi eq, %5, %7 : vector<1x128xi32>
    %9 = arith.extui %8 : vector<1x128xi1> to vector<1x128xi32>
    %10 = vector.shape_cast %9 : vector<1x128xi32> to vector<1x128xi32>
    %11 = vector.broadcast %10 : vector<1x128xi32> to vector<8x128xi32>
    %c1_i32_4 = arith.constant 1 : i32
    %12 = vector.broadcast %c1_i32_4 : i32 to vector<8x128xi32>
    %13 = arith.cmpi eq, %11, %12 : vector<8x128xi32>
    %c2_i32 = arith.constant 2 : i32
    %14 = tpu.dynamic_rotate %2 by %c2_i32 dim 1 : vector<8x128xi32>, i32 -> vector<8x128xi32>
    %15 = vector.extract_strided_slice %14 {offsets = [0, 0], sizes = [1, 128], strides = [1, 1]} : vector<8x128xi32> to vector<1x128xi32>
    %c2_i32_5 = arith.constant 2 : i32
    %16 = vector.broadcast %c2_i32_5 : i32 to vector<1x128xi32>
    %17 = arith.xori %3, %16 : vector<1x128xi32>
    %18 = arith.cmpi eq, %15, %17 : vector<1x128xi32>
    %19 = arith.extui %18 : vector<1x128xi1> to vector<1x128xi32>
    %20 = vector.shape_cast %19 : vector<1x128xi32> to vector<1x128xi32>
    %21 = vector.broadcast %20 : vector<1x128xi32> to vector<8x128xi32>
    %c1_i32_6 = arith.constant 1 : i32
    %22 = vector.broadcast %c1_i32_6 : i32 to vector<8x128xi32>
    %23 = arith.cmpi eq, %21, %22 : vector<8x128xi32>
    %c4_i32 = arith.constant 4 : i32
    %24 = tpu.dynamic_rotate %2 by %c4_i32 dim 1 : vector<8x128xi32>, i32 -> vector<8x128xi32>
    %25 = vector.extract_strided_slice %24 {offsets = [0, 0], sizes = [1, 128], strides = [1, 1]} : vector<8x128xi32> to vector<1x128xi32>
    %c4_i32_7 = arith.constant 4 : i32
    %26 = vector.broadcast %c4_i32_7 : i32 to vector<1x128xi32>
    %27 = arith.xori %3, %26 : vector<1x128xi32>
    %28 = arith.cmpi eq, %25, %27 : vector<1x128xi32>
    %29 = arith.extui %28 : vector<1x128xi1> to vector<1x128xi32>
    %30 = vector.shape_cast %29 : vector<1x128xi32> to vector<1x128xi32>
    %31 = vector.broadcast %30 : vector<1x128xi32> to vector<8x128xi32>
    %c1_i32_8 = arith.constant 1 : i32
    %32 = vector.broadcast %c1_i32_8 : i32 to vector<8x128xi32>
    %33 = arith.cmpi eq, %31, %32 : vector<8x128xi32>
    %c8_i32 = arith.constant 8 : i32
    %34 = tpu.dynamic_rotate %2 by %c8_i32 dim 1 : vector<8x128xi32>, i32 -> vector<8x128xi32>
    %35 = vector.extract_strided_slice %34 {offsets = [0, 0], sizes = [1, 128], strides = [1, 1]} : vector<8x128xi32> to vector<1x128xi32>
    %c8_i32_9 = arith.constant 8 : i32
    %36 = vector.broadcast %c8_i32_9 : i32 to vector<1x128xi32>
    %37 = arith.xori %3, %36 : vector<1x128xi32>
    %38 = arith.cmpi eq, %35, %37 : vector<1x128xi32>
    %39 = arith.extui %38 : vector<1x128xi1> to vector<1x128xi32>
    %40 = vector.shape_cast %39 : vector<1x128xi32> to vector<1x128xi32>
    %41 = vector.broadcast %40 : vector<1x128xi32> to vector<8x128xi32>
    %c1_i32_10 = arith.constant 1 : i32
    %42 = vector.broadcast %c1_i32_10 : i32 to vector<8x128xi32>
    %43 = arith.cmpi eq, %41, %42 : vector<8x128xi32>
    %c1_i32_11 = arith.constant 1 : i32
    %44 = tpu.dynamic_rotate %0 by %c1_i32_11 dim 1 : vector<8x128xf32>, i32 -> vector<8x128xf32>
    %c127_i32 = arith.constant 127 : i32
    %45 = tpu.dynamic_rotate %0 by %c127_i32 dim 1 : vector<8x128xf32>, i32 -> vector<8x128xf32>
    %46 = arith.select %13, %44, %45 : vector<8x128xi1>, vector<8x128xf32>
    %47 = arith.minimumf %0, %46 : vector<8x128xf32>
    %c2_i32_12 = arith.constant 2 : i32
    %48 = tpu.dynamic_rotate %47 by %c2_i32_12 dim 1 : vector<8x128xf32>, i32 -> vector<8x128xf32>
    %c126_i32 = arith.constant 126 : i32
    %49 = tpu.dynamic_rotate %47 by %c126_i32 dim 1 : vector<8x128xf32>, i32 -> vector<8x128xf32>
    %50 = arith.select %23, %48, %49 : vector<8x128xi1>, vector<8x128xf32>
    %51 = arith.minimumf %47, %50 : vector<8x128xf32>
    %c4_i32_13 = arith.constant 4 : i32
    %52 = tpu.dynamic_rotate %51 by %c4_i32_13 dim 1 : vector<8x128xf32>, i32 -> vector<8x128xf32>
    %c124_i32 = arith.constant 124 : i32
    %53 = tpu.dynamic_rotate %51 by %c124_i32 dim 1 : vector<8x128xf32>, i32 -> vector<8x128xf32>
    %54 = arith.select %33, %52, %53 : vector<8x128xi1>, vector<8x128xf32>
    %55 = arith.minimumf %51, %54 : vector<8x128xf32>
    %c8_i32_14 = arith.constant 8 : i32
    %56 = tpu.dynamic_rotate %55 by %c8_i32_14 dim 1 : vector<8x128xf32>, i32 -> vector<8x128xf32>
    %c120_i32 = arith.constant 120 : i32
    %57 = tpu.dynamic_rotate %55 by %c120_i32 dim 1 : vector<8x128xf32>, i32 -> vector<8x128xf32>
    %58 = arith.select %43, %56, %57 : vector<8x128xi1>, vector<8x128xf32>
    %59 = arith.minimumf %55, %58 : vector<8x128xf32>
    %c1_i32_15 = arith.constant 1 : i32
    %60 = tpu.dynamic_rotate %1 by %c1_i32_15 dim 1 : vector<8x128xf32>, i32 -> vector<8x128xf32>
    %c127_i32_16 = arith.constant 127 : i32
    %61 = tpu.dynamic_rotate %1 by %c127_i32_16 dim 1 : vector<8x128xf32>, i32 -> vector<8x128xf32>
    %62 = arith.select %13, %60, %61 : vector<8x128xi1>, vector<8x128xf32>
    %63 = arith.minimumf %1, %62 : vector<8x128xf32>
    %c2_i32_17 = arith.constant 2 : i32
    %64 = tpu.dynamic_rotate %63 by %c2_i32_17 dim 1 : vector<8x128xf32>, i32 -> vector<8x128xf32>
    %c126_i32_18 = arith.constant 126 : i32
    %65 = tpu.dynamic_rotate %63 by %c126_i32_18 dim 1 : vector<8x128xf32>, i32 -> vector<8x128xf32>
    %66 = arith.select %23, %64, %65 : vector<8x128xi1>, vector<8x128xf32>
    %67 = arith.minimumf %63, %66 : vector<8x128xf32>
    %c4_i32_19 = arith.constant 4 : i32
    %68 = tpu.dynamic_rotate %67 by %c4_i32_19 dim 1 : vector<8x128xf32>, i32 -> vector<8x128xf32>
    %c124_i32_20 = arith.constant 124 : i32
    %69 = tpu.dynamic_rotate %67 by %c124_i32_20 dim 1 : vector<8x128xf32>, i32 -> vector<8x128xf32>
    %70 = arith.select %33, %68, %69 : vector<8x128xi1>, vector<8x128xf32>
    %71 = arith.minimumf %67, %70 : vector<8x128xf32>
    %c8_i32_21 = arith.constant 8 : i32
    %72 = tpu.dynamic_rotate %71 by %c8_i32_21 dim 1 : vector<8x128xf32>, i32 -> vector<8x128xf32>
    %c120_i32_22 = arith.constant 120 : i32
    %73 = tpu.dynamic_rotate %71 by %c120_i32_22 dim 1 : vector<8x128xf32>, i32 -> vector<8x128xf32>
    %74 = arith.select %43, %72, %73 : vector<8x128xi1>, vector<8x128xf32>
    %75 = arith.minimumf %71, %74 : vector<8x128xf32>
    %76 = arith.subf %0, %59 : vector<8x128xf32>
    %77 = arith.subf %1, %75 : vector<8x128xf32>
    %c1_i32_23 = arith.constant 1 : i32
    %78 = tpu.dynamic_rotate %76 by %c1_i32_23 dim 1 : vector<8x128xf32>, i32 -> vector<8x128xf32>
    %c127_i32_24 = arith.constant 127 : i32
    %79 = tpu.dynamic_rotate %76 by %c127_i32_24 dim 1 : vector<8x128xf32>, i32 -> vector<8x128xf32>
    %80 = arith.select %13, %78, %79 : vector<8x128xi1>, vector<8x128xf32>
    %81 = arith.addf %76, %80 : vector<8x128xf32>
    %c2_i32_25 = arith.constant 2 : i32
    %82 = tpu.dynamic_rotate %81 by %c2_i32_25 dim 1 : vector<8x128xf32>, i32 -> vector<8x128xf32>
    %c126_i32_26 = arith.constant 126 : i32
    %83 = tpu.dynamic_rotate %81 by %c126_i32_26 dim 1 : vector<8x128xf32>, i32 -> vector<8x128xf32>
    %84 = arith.select %23, %82, %83 : vector<8x128xi1>, vector<8x128xf32>
    %85 = arith.addf %81, %84 : vector<8x128xf32>
    %c4_i32_27 = arith.constant 4 : i32
    %86 = tpu.dynamic_rotate %85 by %c4_i32_27 dim 1 : vector<8x128xf32>, i32 -> vector<8x128xf32>
    %c124_i32_28 = arith.constant 124 : i32
    %87 = tpu.dynamic_rotate %85 by %c124_i32_28 dim 1 : vector<8x128xf32>, i32 -> vector<8x128xf32>
    %88 = arith.select %33, %86, %87 : vector<8x128xi1>, vector<8x128xf32>
    %89 = arith.addf %85, %88 : vector<8x128xf32>
    %c8_i32_29 = arith.constant 8 : i32
    %90 = tpu.dynamic_rotate %89 by %c8_i32_29 dim 1 : vector<8x128xf32>, i32 -> vector<8x128xf32>
    %c120_i32_30 = arith.constant 120 : i32
    %91 = tpu.dynamic_rotate %89 by %c120_i32_30 dim 1 : vector<8x128xf32>, i32 -> vector<8x128xf32>
    %92 = arith.select %43, %90, %91 : vector<8x128xi1>, vector<8x128xf32>
    %93 = arith.addf %89, %92 : vector<8x128xf32>
    %c1_i32_31 = arith.constant 1 : i32
    %94 = tpu.dynamic_rotate %77 by %c1_i32_31 dim 1 : vector<8x128xf32>, i32 -> vector<8x128xf32>
    %c127_i32_32 = arith.constant 127 : i32
    %95 = tpu.dynamic_rotate %77 by %c127_i32_32 dim 1 : vector<8x128xf32>, i32 -> vector<8x128xf32>
    %96 = arith.select %13, %94, %95 : vector<8x128xi1>, vector<8x128xf32>
    %97 = arith.addf %77, %96 : vector<8x128xf32>
    %c2_i32_33 = arith.constant 2 : i32
    %98 = tpu.dynamic_rotate %97 by %c2_i32_33 dim 1 : vector<8x128xf32>, i32 -> vector<8x128xf32>
    %c126_i32_34 = arith.constant 126 : i32
    %99 = tpu.dynamic_rotate %97 by %c126_i32_34 dim 1 : vector<8x128xf32>, i32 -> vector<8x128xf32>
    %100 = arith.select %23, %98, %99 : vector<8x128xi1>, vector<8x128xf32>
    %101 = arith.addf %97, %100 : vector<8x128xf32>
    %c4_i32_35 = arith.constant 4 : i32
    %102 = tpu.dynamic_rotate %101 by %c4_i32_35 dim 1 : vector<8x128xf32>, i32 -> vector<8x128xf32>
    %c124_i32_36 = arith.constant 124 : i32
    %103 = tpu.dynamic_rotate %101 by %c124_i32_36 dim 1 : vector<8x128xf32>, i32 -> vector<8x128xf32>
    %104 = arith.select %33, %102, %103 : vector<8x128xi1>, vector<8x128xf32>
    %105 = arith.addf %101, %104 : vector<8x128xf32>
    %c8_i32_37 = arith.constant 8 : i32
    %106 = tpu.dynamic_rotate %105 by %c8_i32_37 dim 1 : vector<8x128xf32>, i32 -> vector<8x128xf32>
    %c120_i32_38 = arith.constant 120 : i32
    %107 = tpu.dynamic_rotate %105 by %c120_i32_38 dim 1 : vector<8x128xf32>, i32 -> vector<8x128xf32>
    %108 = arith.select %43, %106, %107 : vector<8x128xi1>, vector<8x128xf32>
    %109 = arith.addf %105, %108 : vector<8x128xf32>
    %cst = arith.constant 0.000000e+00 : f32
    %110 = vector.broadcast %cst : f32 to vector<8x128xf32>
    %111 = arith.cmpf oeq, %93, %110 : vector<8x128xf32>
    %cst_39 = arith.constant 1.000000e+00 : f32
    %112 = vector.broadcast %cst_39 : f32 to vector<8x128xf32>
    %113 = arith.select %111, %112, %93 : vector<8x128xi1>, vector<8x128xf32>
    %cst_40 = arith.constant 0.000000e+00 : f32
    %114 = vector.broadcast %cst_40 : f32 to vector<8x128xf32>
    %115 = arith.cmpf oeq, %109, %114 : vector<8x128xf32>
    %cst_41 = arith.constant 1.000000e+00 : f32
    %116 = vector.broadcast %cst_41 : f32 to vector<8x128xf32>
    %117 = arith.select %115, %116, %109 : vector<8x128xi1>, vector<8x128xf32>
    %118 = arith.divf %76, %113 : vector<8x128xf32>
    %119 = arith.divf %77, %117 : vector<8x128xf32>
    %120 = arith.subf %118, %119 : vector<8x128xf32>
    %121 = arith.subf %93, %109 : vector<8x128xf32>
    %cst_42 = arith.constant 6.250000e-02 : f32
    %122 = vector.broadcast %cst_42 : f32 to vector<8x128xf32>
    %123 = arith.mulf %121, %122 : vector<8x128xf32>
    %124 = arith.subf %59, %75 : vector<8x128xf32>
    %125 = arith.addf %123, %124 : vector<8x128xf32>
    %126 = arith.mulf %125, %125 : vector<8x128xf32>
    %127 = arith.mulf %120, %120 : vector<8x128xf32>
    %cst_43 = arith.constant 1.000000e+01 : f32
    %128 = vector.broadcast %cst_43 : f32 to vector<8x128xf32>
    %129 = arith.mulf %128, %127 : vector<8x128xf32>
    %130 = arith.addf %126, %129 : vector<8x128xf32>
    %c0_44 = arith.constant 0 : index
    %c0_45 = arith.constant 0 : index
    %131 = vector.load %arg3[%c0_44, %c0_45] : memref<8x128xf32, #tpu.memory_space<vmem>>, vector<8x128xf32>
    tpu.vector_store %arg3[%c0_44, %c0_45], %130 {strides = array<i32>} : memref<8x128xf32, #tpu.memory_space<vmem>>, vector<8x128xf32>,
    return
  }
  func.func @transform_0(%arg0: i32) -> (i32, i32) {
    %c0_i32 = arith.constant 0 : i32
    %c0_i32_0 = arith.constant 0 : i32
    return %arg0, %c0_i32 : i32, i32
  }
  func.func @transform_1(%arg0: i32) -> (i32, i32) {
    %c0_i32 = arith.constant 0 : i32
    %c0_i32_0 = arith.constant 0 : i32
    return %arg0, %c0_i32 : i32, i32
  }
  func.func @transform_2(%arg0: i32) -> (i32, i32) {
    %c0_i32 = arith.constant 0 : i32
    %c0_i32_0 = arith.constant 0 : i32
    return %arg0, %c0_i32 : i32, i32
  }
}

</mosaic_0001>

<llo_original>
// kernel: tpu_custom_call.1
$region0: #{tpu_custom_call.1}
  #allocation0 [shape = 'u32[]', space=smem, size = 0x4, offset = 0x4, fixed_abs, tag = 'smem constant byte address 0x4 - core index']
  #allocation1 [shape = 'u32[144,128]{1,0:T(1,128)}', space=vmem, size = 0x12000, scoped, tag = 'internal scratch']
  %s0 = inlined_call_operand.hbm [shape: f32[8,128], index: 0, kind: input, shape index: {}]
  %s1 = inlined_call_operand.hbm [shape: f32[8,128], index: 1, kind: input, shape index: {}]
  %s2 = inlined_call_operand.hbm [shape: f32[8,128], index: 2, kind: output, shape index: {}]
  %s3 = sld [smem:[#allocation0]]
  $region26: #{tpu_custom_call.1} parent=0
    _
  %s5 = ssub.s32 1, %s3
  %s6 = scalar_select 0, %s5, %s3
  $region1: #{tpu_custom_call.1} parent=0
    #allocation2 [shape = 'u8[4096]{0}', space=vmem, size = 0x1000, scoped, tag = 'input window, operand 0, single buffered']
    #allocation3 [shape = 's32[1]{0}', space=sflag, size = 0x4, scoped, tag = 'scoped memory for tpu_custom_call.1']
    #allocation4 [shape = 's32[1]{0}', space=sflag, size = 0x4, scoped, tag = 'scoped memory for tpu_custom_call.1']
    #allocation5 [shape = 'u8[4096]{0}', space=vmem, size = 0x1000, scoped, tag = 'input window, operand 1, single buffered']
    #allocation6 [shape = 's32[1]{0}', space=sflag, size = 0x4, scoped, tag = 'scoped memory for tpu_custom_call.1']
    #allocation7 [shape = 'u8[4096]{0}', space=vmem, size = 0x1000, scoped, tag = 'output window, operand 0, single buffered']
    %7 = vsyncpa [#allocation3], 0
    %8 = vsyncpa [#allocation6], 0
    %9 = vsyncpa [#allocation4], 0
    // Predicated region
    $region2: #{tpu_custom_call.1} parent=1 // pred_check
      _
    $region3: #{tpu_custom_call.1} parent=1 // pred_check_branch
      %11 = sbr.rel (0) target = $region5
    $region4: #{tpu_custom_call.1} parent=1 // pred_region
      %s13 = ssub.s32 128, 128
      %14 = vsyncadd [#allocation3], %s13
      %s16 = sshll.u32 [#allocation2], 4
      %s17 = int_to_ptr.vmem [resolvable:$true] %s16
      %19 = dma.hbm_to_vmem [thread:$0]  %s0, 128, %s17, [#allocation3]
    $region5: #{tpu_custom_call.1} parent=1 // pred_fallthru
      _
    // Predicated region
    $region6: #{tpu_custom_call.1} parent=1 // pred_check
      _
    $region7: #{tpu_custom_call.1} parent=1 // pred_check_branch
      %21 = sbr.rel (0) target = $region9
    $region8: #{tpu_custom_call.1} parent=1 // pred_region
      %s23 = ssub.s32 128, 128
      %24 = vsyncadd [#allocation6], %s23
      %s26 = sshll.u32 [#allocation5], 4
      %s27 = int_to_ptr.vmem [resolvable:$true] %s26
      %29 = dma.hbm_to_vmem [thread:$0]  %s1, 128, %s27, [#allocation6]
    $region9: #{tpu_custom_call.1} parent=1 // pred_fallthru
      _
    // Predicated region
    $region10: #{tpu_custom_call.1} parent=1 // pred_check
      _
    $region11: #{tpu_custom_call.1} parent=1 // pred_check_branch
      %31 = sbr.rel (0) target = $region13
    $region12: #{tpu_custom_call.1} parent=1 // pred_region
      %32 = dma.done [#allocation3], 128
    $region13: #{tpu_custom_call.1} parent=1 // pred_fallthru
      _
    // Predicated region
    $region14: #{tpu_custom_call.1} parent=1 // pred_check
      _
    $region15: #{tpu_custom_call.1} parent=1 // pred_check_branch
      %34 = sbr.rel (0) target = $region17
    $region16: #{tpu_custom_call.1} parent=1 // pred_region
      %35 = dma.done [#allocation6], 128
    $region17: #{tpu_custom_call.1} parent=1 // pred_fallthru
      _
    %v36 = vld [vmem:[#allocation2] sm:$0xff]
    %v37 = vld [vmem:[#allocation5] sm:$0xff]
    %v38 = vlaneseq
    %v39 = vand.u32 %v38, 127
    %40 = vrot.lane.b32.xlu0 %v39, 1
    %v41 = vpop.permute.xlu0 %40
    %v42 = vxor.u32 %v39, 1
    %vm43 = vcmp.eq.s32.totalorder %v41, %v42
    %v44 = vsel %vm43, 1, 0
    %v45 = vlaneseq
    %v46 = vshrl.u32 %v45, 7
    %v47 = vsub.s32 0, %v46
    %v48 = vrot.slane %v44, %v47
    %vm49 = vcmp.eq.s32.totalorder %v48, 1
    %50 = vrot.lane.b32.xlu0 %v39, 2
    %v51 = vpop.permute.xlu0 %50
    %v52 = vxor.u32 %v39, 2
    %vm53 = vcmp.eq.s32.totalorder %v51, %v52
    %v54 = vsel %vm53, 1, 0
    %v55 = vlaneseq
    %v56 = vshrl.u32 %v55, 7
    %v57 = vsub.s32 0, %v56
    %v58 = vrot.slane %v54, %v57
    %vm59 = vcmp.eq.s32.totalorder %v58, 1
    %60 = vrot.lane.b32.xlu0 %v39, 4
    %v61 = vpop.permute.xlu0 %60
    %v62 = vxor.u32 %v39, 4
    %vm63 = vcmp.eq.s32.totalorder %v61, %v62
    %v64 = vsel %vm63, 1, 0
    %v65 = vlaneseq
    %v66 = vshrl.u32 %v65, 7
    %v67 = vsub.s32 0, %v66
    %v68 = vrot.slane %v64, %v67
    %vm69 = vcmp.eq.s32.totalorder %v68, 1
    %70 = vrot.lane.b32.xlu0 %v39, 8
    %v71 = vpop.permute.xlu0 %70
    %v72 = vxor.u32 %v39, 8
    %vm73 = vcmp.eq.s32.totalorder %v71, %v72
    %v74 = vsel %vm73, 1, 0
    %v75 = vlaneseq
    %v76 = vshrl.u32 %v75, 7
    %v77 = vsub.s32 0, %v76
    %v78 = vrot.slane %v74, %v77
    %vm79 = vcmp.eq.s32.totalorder %v78, 1
    %80 = vrot.lane.b32.xlu0 %v36, 1
    %v81 = vpop.permute.xlu0 %80
    %82 = vrot.lane.b32.xlu0 %v36, 127
    %v83 = vpop.permute.xlu0 %82
    %v84 = vsel %vm49, %v81, %v83
    %v85 = vmin.f32 %v36, %v84
    %86 = vrot.lane.b32.xlu0 %v85, 2
    %v87 = vpop.permute.xlu0 %86
    %88 = vrot.lane.b32.xlu0 %v85, 126
    %v89 = vpop.permute.xlu0 %88
    %v90 = vsel %vm59, %v87, %v89
    %v91 = vmin.f32 %v85, %v90
    %92 = vrot.lane.b32.xlu0 %v91, 4
    %v93 = vpop.permute.xlu0 %92
    %94 = vrot.lane.b32.xlu0 %v91, 124
    %v95 = vpop.permute.xlu0 %94
    %v96 = vsel %vm69, %v93, %v95
    %v97 = vmin.f32 %v91, %v96
    %98 = vrot.lane.b32.xlu0 %v97, 8
    %v99 = vpop.permute.xlu0 %98
    %100 = vrot.lane.b32.xlu0 %v97, 120
    %v101 = vpop.permute.xlu0 %100
    %v102 = vsel %vm79, %v99, %v101
    %v103 = vmin.f32 %v97, %v102
    %104 = vrot.lane.b32.xlu0 %v37, 1
    %v105 = vpop.permute.xlu0 %104
    %106 = vrot.lane.b32.xlu0 %v37, 127
    %v107 = vpop.permute.xlu0 %106
    %v108 = vsel %vm49, %v105, %v107
    %v109 = vmin.f32 %v37, %v108
    %110 = vrot.lane.b32.xlu0 %v109, 2
    %v111 = vpop.permute.xlu0 %110
    %112 = vrot.lane.b32.xlu0 %v109, 126
    %v113 = vpop.permute.xlu0 %112
    %v114 = vsel %vm59, %v111, %v113
    %v115 = vmin.f32 %v109, %v114
    %116 = vrot.lane.b32.xlu0 %v115, 4
    %v117 = vpop.permute.xlu0 %116
    %118 = vrot.lane.b32.xlu0 %v115, 124
    %v119 = vpop.permute.xlu0 %118
    %v120 = vsel %vm69, %v117, %v119
    %v121 = vmin.f32 %v115, %v120
    %122 = vrot.lane.b32.xlu0 %v121, 8
    %v123 = vpop.permute.xlu0 %122
    %124 = vrot.lane.b32.xlu0 %v121, 120
    %v125 = vpop.permute.xlu0 %124
    %v126 = vsel %vm79, %v123, %v125
    %v127 = vmin.f32 %v121, %v126
    %v128 = vsub.f32 %v36, %v103
    %v129 = vsub.f32 %v37, %v127
    %130 = vrot.lane.b32.xlu0 %v128, 1
    %v131 = vpop.permute.xlu0 %130
    %132 = vrot.lane.b32.xlu0 %v128, 127
    %v133 = vpop.permute.xlu0 %132
    %v134 = vsel %vm49, %v131, %v133
    %v135 = vadd.f32 %v128, %v134
    %136 = vrot.lane.b32.xlu0 %v135, 2
    %v137 = vpop.permute.xlu0 %136
    %138 = vrot.lane.b32.xlu0 %v135, 126
    %v139 = vpop.permute.xlu0 %138
    %v140 = vsel %vm59, %v137, %v139
    %v141 = vadd.f32 %v135, %v140
    %142 = vrot.lane.b32.xlu0 %v141, 4
    %v143 = vpop.permute.xlu0 %142
    %144 = vrot.lane.b32.xlu0 %v141, 124
    %v145 = vpop.permute.xlu0 %144
    %v146 = vsel %vm69, %v143, %v145
    %v147 = vadd.f32 %v141, %v146
    %148 = vrot.lane.b32.xlu0 %v147, 8
    %v149 = vpop.permute.xlu0 %148
    %150 = vrot.lane.b32.xlu0 %v147, 120
    %v151 = vpop.permute.xlu0 %150
    %v152 = vsel %vm79, %v149, %v151
    %v153 = vadd.f32 %v147, %v152
    %154 = vrot.lane.b32.xlu0 %v129, 1
    %v155 = vpop.permute.xlu0 %154
    %156 = vrot.lane.b32.xlu0 %v129, 127
    %v157 = vpop.permute.xlu0 %156
    %v158 = vsel %vm49, %v155, %v157
    %v159 = vadd.f32 %v129, %v158
    %160 = vrot.lane.b32.xlu0 %v159, 2
    %v161 = vpop.permute.xlu0 %160
    %162 = vrot.lane.b32.xlu0 %v159, 126
    %v163 = vpop.permute.xlu0 %162
    %v164 = vsel %vm59, %v161, %v163
    %v165 = vadd.f32 %v159, %v164
    %166 = vrot.lane.b32.xlu0 %v165, 4
    %v167 = vpop.permute.xlu0 %166
    %168 = vrot.lane.b32.xlu0 %v165, 124
    %v169 = vpop.permute.xlu0 %168
    %v170 = vsel %vm69, %v167, %v169
    %v171 = vadd.f32 %v165, %v170
    %172 = vrot.lane.b32.xlu0 %v171, 8
    %v173 = vpop.permute.xlu0 %172
    %174 = vrot.lane.b32.xlu0 %v171, 120
    %v175 = vpop.permute.xlu0 %174
    %v176 = vsel %vm79, %v173, %v175
    %v177 = vadd.f32 %v171, %v176
    %vm178 = vcmp.eq.f32.partialorder %v153, 0.0
    %v179 = vsel %vm178, 1.0, %v153
    %vm180 = vcmp.eq.f32.partialorder %v177, 0.0
    %v181 = vsel %vm180, 1.0, %v177
    %v182 = vrcp.pop %v179
    %v183 = vmul.f32 %v128, %v182
    %v184 = vrcp.pop %v181
    %v185 = vmul.f32 %v129, %v184
    %v186 = vsub.f32 %v183, %v185
    %v187 = vsub.f32 %v153, %v177
    %v188 = vmul.f32 %v187, 0.0625
    %v189 = vsub.f32 %v103, %v127
    %v190 = vadd.f32 %v188, %v189
    %v191 = vmul.f32 %v190, %v190
    %v192 = vmul.f32 %v186, %v186
    %v193 = vmul.f32 %v192, 10.0
    %v194 = vadd.f32 %v191, %v193
    %195 = vst [vmem:[#allocation7] sm:$0xff] %v194
    // Predicated region
    $region18: #{tpu_custom_call.1} parent=1 // pred_check
      _
    $region19: #{tpu_custom_call.1} parent=1 // pred_check_branch
      %197 = sbr.rel (0) target = $region21
    $region20: #{tpu_custom_call.1} parent=1 // pred_region
      %s199 = ssub.s32 128, 128
      %200 = vsyncadd [#allocation4], %s199
      %s202 = sshll.u32 [#allocation7], 4
      %s203 = int_to_ptr.vmem [resolvable:$true] %s202
      %205 = dma.vmem_to_hbm [thread:$0]  %s203, 128, %s2, [#allocation4]
    $region21: #{tpu_custom_call.1} parent=1 // pred_fallthru
      _
    // Predicated region
    $region22: #{tpu_custom_call.1} parent=1 // pred_check
      _
    $region23: #{tpu_custom_call.1} parent=1 // pred_check_branch
      %207 = sbr.rel (0) target = $region25
    $region24: #{tpu_custom_call.1} parent=1 // pred_region
      %208 = dma.done [#allocation4], 128
    $region25: #{tpu_custom_call.1} parent=1 // pred_fallthru
      _
    %209 = vsyncpa [#allocation3], 1
    %210 = vsyncpa [#allocation6], 1
    %211 = vsyncpa [#allocation4], 1

</llo_original>
